<compile_context>
chip_gen: v6e
topology: v6e:2x2x1
jax: 0.10.0
libtpu: 0.0.40
codegen_flags: <defaults>
</compile_context>

<pallas_src>
import jax
import jax.numpy as jnp
from jax.experimental import pallas as pl
from jax.experimental.pallas import tpu as pltpu


def _fourier_kernel(a0_ref, x_ref, omn_ref, a_ref, b_ref, o_ref):
    # a0_ref : (1,)    SMEM scalar
    # x_ref  : (TB, D) VMEM input tile
    # omn_ref: (1, N)  omega * [1..N]
    # a_ref  : (1, N)  cosine coefficients
    # b_ref  : (1, N)  sine coefficients
    x = x_ref[...].astype(jnp.float32)                                  # (TB, D)

    # r = ||x||_2 over the feature axis, clamped (torch clamp_min(1e-6)).
    r = jnp.sqrt(jnp.sum(x * x, axis=1, keepdims=True))                 # (TB, 1)
    r = jnp.maximum(r, 1e-6)

    # angle[t, n] = omega * n * r[t]; omega*n precomputed host-side.
    angle = r * omn_ref[...]                                            # (TB, N)

    # Single fused reduction: a0 + sum_n(cos*a + sin*b).
    f_r = a0_ref[0] + jnp.sum(
        jnp.cos(angle) * a_ref[...] + jnp.sin(angle) * b_ref[...],
        axis=1, keepdims=True)                                          # (TB, 1)

    o_ref[...] = (f_r * x).astype(o_ref.dtype)


def _choose_block_b(B, D, itemsize):
    """Batch tile: VMEM-budgeted, sublane-aligned, divisor-of-B preferred."""
    sub = 16 if itemsize == 2 else 8          # bf16 needs 16-row sublane tiles
    tile_budget = 2 * 1024 * 1024             # ~2 MiB x tile; ~4 live tiles total
    rows = max(sub, tile_budget // max(D * itemsize, 1))
    rows = max(sub, (rows // sub) * sub)      # multiple of sublane tile

    if B <= rows:
        return B                              # single block == full dim (legal)

    # Prefer a divisor of B (multiple of sub) so no padding copy is needed.
    min_ok = max(sub, (rows // 4 // sub) * sub)
    cand = rows
    while cand >= min_ok:
        if B % cand == 0:
            return cand
        cand -= sub
    return rows                               # fall back to pad path in wrapper


def fourier_nonlinear_map(x, a0, a, b, *, omega=1.0, block_b=None):
    """Pallas TPU implementation of FourierNonlinearMap.forward.

    x : (B, D) float array
    a0: scalar parameter
    a, b: (N,) Fourier coefficients
    """
    B, D = x.shape
    N = int(a.shape[0])
    itemsize = jnp.dtype(x.dtype).itemsize

    if block_b is None:
        block_b = _choose_block_b(B, D, itemsize)
    block_b = max(1, min(int(block_b), B))

    grid_b = pl.cdiv(B, block_b)
    B_pad = grid_b * block_b
    x_in = x if B_pad == B else jnp.pad(x, ((0, B_pad - B), (0, 0)))

    a0_arr = jnp.asarray(a0, jnp.float32).reshape(1)
    a2 = jnp.asarray(a, jnp.float32).reshape(1, N)
    b2 = jnp.asarray(b, jnp.float32).reshape(1, N)
    omn = (float(omega) * jnp.arange(1, N + 1, dtype=jnp.float32)).reshape(1, N)

    cost = pl.CostEstimate(
        flops=5 * B * D + 6 * B * N,
        transcendentals=2 * B * N + B,
        bytes_accessed=2 * B * D * itemsize + (3 * N + 1) * 4,
    )

    out = pl.pallas_call(
        _fourier_kernel,
        out_shape=jax.ShapeDtypeStruct((B_pad, D), x.dtype),
        grid=(grid_b,),
        in_specs=[
            pl.BlockSpec(memory_space=pltpu.MemorySpace.SMEM),       # a0 scalar
            pl.BlockSpec((block_b, D), lambda i: (i, 0)),            # x tile
            pl.BlockSpec((1, N), lambda i: (0, 0)),                  # omega * n
            pl.BlockSpec((1, N), lambda i: (0, 0)),                  # a
            pl.BlockSpec((1, N), lambda i: (0, 0)),                  # b
        ],
        out_specs=pl.BlockSpec((block_b, D), lambda i: (i, 0)),
        compiler_params=pltpu.CompilerParams(
            dimension_semantics=("parallel",),
            vmem_limit_bytes=32 * 1024 * 1024,
        ),
        cost_estimate=cost,
    )(a0_arr, x_in, omn, a2, b2)

    return out if B_pad == B else out[:B]


def _reference(x, a0, a, b, omega):
    """Pure-JAX reference mirroring the PyTorch forward exactly."""
    r = jnp.maximum(jnp.linalg.norm(x, axis=1, keepdims=True), 1e-6)
    n = jnp.arange(1, a.shape[0] + 1, dtype=r.dtype).reshape(1, -1)
    angle = omega * (r @ n)
    f_r = (a0
           + jnp.sum(jnp.cos(angle) * a.reshape(1, -1), axis=1, keepdims=True)
           + jnp.sum(jnp.sin(angle) * b.reshape(1, -1), axis=1, keepdims=True))
    return f_r * x


if __name__ == "__main__":
    omega = 1.0
    N = 16

    key = jax.random.PRNGKey(0)
    k0, ka, kb, kx1, kx2, kx3 = jax.random.split(key, 6)

    # Deterministic non-trivial parameters (default torch init would make the
    # forward trivially return x).  Shapes match __init__: a0 (1,), a/b (N,).
    a0 = 1.0 + 0.1 * jax.random.normal(k0, (), dtype=jnp.float32)
    a = 0.1 * jax.random.normal(ka, (N,), dtype=jnp.float32)
    b = 0.1 * jax.random.normal(kb, (N,), dtype=jnp.float32)

    # Case 1: small batch -> single full-batch block (no padding, no tiling).
    B1, D1 = 8, 32
    x1 = jax.random.normal(kx1, (B1, D1), dtype=jnp.float32)
    o1 = jax.block_until_ready(fourier_nonlinear_map(x1, a0, a, b, omega=omega))
    assert o1.shape == (B1, D1)
    assert jnp.allclose(o1, _reference(x1, a0, a, b, omega), atol=1e-5, rtol=1e-5), \
        "mismatch vs reference (single block)"

    # Case 2: tiled grid where the block divides the batch (no padding path).
    B2, D2 = 96, 32
    x2 = jax.random.normal(kx2, (B2, D2), dtype=jnp.float32)
    o2 = jax.block_until_ready(
        fourier_nonlinear_map(x2, a0, a, b, omega=omega, block_b=32))
    assert o2.shape == (B2, D2)
    assert jnp.allclose(o2, _reference(x2, a0, a, b, omega), atol=1e-5, rtol=1e-5), \
        "mismatch vs reference (tiled, divisible)"

    # Case 3: tiled grid with non-divisible batch (pad fallback path).
    B3, D3 = 100, 32
    x3 = jax.random.normal(kx3, (B3, D3), dtype=jnp.float32)
    o3 = jax.block_until_ready(
        fourier_nonlinear_map(x3, a0, a, b, omega=omega, block_b=32))
    assert o3.shape == (B3, D3)
    assert jnp.allclose(o3, _reference(x3, a0, a, b, omega), atol=1e-5, rtol=1e-5), \
        "mismatch vs reference (tiled, padded)"

    print("KERNEL_OK")
</pallas_src>

<mosaic_0001>
module attributes {stable_mosaic.version = 11 : i64} {
  func.func @_fourier_kernel(%arg0: i32, %arg1: memref<1xf32, #tpu.memory_space<smem>>, %arg2: memref<8x32xf32, #tpu.memory_space<vmem>>, %arg3: memref<1x16xf32, #tpu.memory_space<vmem>>, %arg4: memref<1x16xf32, #tpu.memory_space<vmem>>, %arg5: memref<1x16xf32, #tpu.memory_space<vmem>>, %arg6: memref<8x32xf32, #tpu.memory_space<vmem>>) attributes {dimension_semantics = [#tpu.dimension_semantics<parallel>], iteration_bounds = array<i64: 1>, scalar_prefetch = 0 : i64, scratch_operands = 0 : i64, tpu.core_type = #tpu.core_type<tc>, window_params = [{transform_indices = @transform_0, window_bounds = array<i64: 1>}, {transform_indices = @transform_1, window_bounds = array<i64: 8, 32>}, {pipeline_mode = #tpu.pipeline_mode<synchronous>, transform_indices = @transform_2, window_bounds = array<i64: 1, 16>}, {pipeline_mode = #tpu.pipeline_mode<synchronous>, transform_indices = @transform_3, window_bounds = array<i64: 1, 16>}, {pipeline_mode = #tpu.pipeline_mode<synchronous>, transform_indices = @transform_4, window_bounds = array<i64: 1, 16>}, {transform_indices = @transform_5, window_bounds = array<i64: 8, 32>}]} {
    %c0 = arith.constant 0 : index
    %c0_0 = arith.constant 0 : index
    %0 = vector.load %arg2[%c0, %c0_0] : memref<8x32xf32, #tpu.memory_space<vmem>>, vector<8x32xf32>
    %1 = arith.mulf %0, %0 : vector<8x32xf32>
    %cst = arith.constant dense<0.000000e+00> : vector<8xf32>
    %2 = vector.multi_reduction <add>, %1, %cst [1] : vector<8x32xf32> to vector<8xf32>
    %3 = vector.shape_cast %2 : vector<8xf32> to vector<8x1xf32>
    %4 = math.sqrt %3 : vector<8x1xf32>
    %cst_1 = arith.constant 9.99999997E-7 : f32
    %5 = vector.broadcast %cst_1 : f32 to vector<8x1xf32>
    %6 = arith.maximumf %4, %5 : vector<8x1xf32>
    %c0_2 = arith.constant 0 : index
    %c0_3 = arith.constant 0 : index
    %7 = vector.load %arg3[%c0_2, %c0_3] : memref<1x16xf32, #tpu.memory_space<vmem>>, vector<1x16xf32>
    %8 = vector.broadcast %6 : vector<8x1xf32> to vector<8x16xf32>
    %9 = vector.broadcast %7 : vector<1x16xf32> to vector<8x16xf32>
    %10 = arith.mulf %8, %9 : vector<8x16xf32>
    %c0_4 = arith.constant 0 : index
    %11 = memref.load %arg1[%c0_4] : memref<1xf32, #tpu.memory_space<smem>>
    %12 = math.cos %10 : vector<8x16xf32>
    %c0_5 = arith.constant 0 : index
    %c0_6 = arith.constant 0 : index
    %13 = vector.load %arg4[%c0_5, %c0_6] : memref<1x16xf32, #tpu.memory_space<vmem>>, vector<1x16xf32>
    %14 = vector.broadcast %13 : vector<1x16xf32> to vector<8x16xf32>
    %15 = arith.mulf %12, %14 : vector<8x16xf32>
    %16 = math.sin %10 : vector<8x16xf32>
    %c0_7 = arith.constant 0 : index
    %c0_8 = arith.constant 0 : index
    %17 = vector.load %arg5[%c0_7, %c0_8] : memref<1x16xf32, #tpu.memory_space<vmem>>, vector<1x16xf32>
    %18 = vector.broadcast %17 : vector<1x16xf32> to vector<8x16xf32>
    %19 = arith.mulf %16, %18 : vector<8x16xf32>
    %20 = arith.addf %15, %19 : vector<8x16xf32>
    %cst_9 = arith.constant dense<0.000000e+00> : vector<8xf32>
    %21 = vector.multi_reduction <add>, %20, %cst_9 [1] : vector<8x16xf32> to vector<8xf32>
    %22 = vector.shape_cast %21 : vector<8xf32> to vector<8x1xf32>
    %23 = vector.broadcast %11 : f32 to vector<8x1xf32>
    %24 = arith.addf %23, %22 : vector<8x1xf32>
    %25 = vector.broadcast %24 : vector<8x1xf32> to vector<8x32xf32>
    %26 = arith.mulf %25, %0 : vector<8x32xf32>
    %c0_10 = arith.constant 0 : index
    %c0_11 = arith.constant 0 : index
    %27 = vector.load %arg6[%c0_10, %c0_11] : memref<8x32xf32, #tpu.memory_space<vmem>>, vector<8x32xf32>
    tpu.vector_store %arg6[%c0_10, %c0_11], %26 {strides = array<i32>} : memref<8x32xf32, #tpu.memory_space<vmem>>, vector<8x32xf32>,
    return
  }
  func.func @transform_0(%arg0: i32) -> i32 {
    %c0_i32 = arith.constant 0 : i32
    %c0_i32_0 = arith.constant 0 : i32
    return %c0_i32 : i32
  }
  func.func @transform_1(%arg0: i32) -> (i32, i32) {
    %c0_i32 = arith.constant 0 : i32
    %c0_i32_0 = arith.constant 0 : i32
    return %arg0, %c0_i32 : i32, i32
  }
  func.func @transform_2(%arg0: i32) -> (i32, i32) {
    %c0_i32 = arith.constant 0 : i32
    %c0_i32_0 = arith.constant 0 : i32
    %c0_i32_1 = arith.constant 0 : i32
    return %c0_i32, %c0_i32_0 : i32, i32
  }
  func.func @transform_3(%arg0: i32) -> (i32, i32) {
    %c0_i32 = arith.constant 0 : i32
    %c0_i32_0 = arith.constant 0 : i32
    %c0_i32_1 = arith.constant 0 : i32
    return %c0_i32, %c0_i32_0 : i32, i32
  }
  func.func @transform_4(%arg0: i32) -> (i32, i32) {
    %c0_i32 = arith.constant 0 : i32
    %c0_i32_0 = arith.constant 0 : i32
    %c0_i32_1 = arith.constant 0 : i32
    return %c0_i32, %c0_i32_0 : i32, i32
  }
  func.func @transform_5(%arg0: i32) -> (i32, i32) {
    %c0_i32 = arith.constant 0 : i32
    %c0_i32_0 = arith.constant 0 : i32
    return %arg0, %c0_i32 : i32, i32
  }
}

</mosaic_0001>

<llo_original>
// kernel: tpu_custom_call.1
$region0: #{tpu_custom_call.1}
  #allocation0 [shape = 'u32[]', space=smem, size = 0x4, offset = 0x4, fixed_abs, tag = 'smem constant byte address 0x4 - core index']
  #allocation1 [shape = 'u32[144,128]{1,0:T(1,128)}', space=vmem, size = 0x12000, scoped, tag = 'internal scratch']
  #allocation2 [shape = 'f32[1]{0:T(128)S(6)}', space=smem, size = 0x200, scoped, tag = 'scoped memory for tpu_custom_call.1']
  %s0 = inlined_call_operand.<no memory space> [shape: f32[1], index: 0, kind: input, shape index: {}]
  %s1 = inlined_call_operand.hbm [shape: f32[8,32], index: 1, kind: input, shape index: {}]
  %s2 = inlined_call_operand.vmem [shape: f32[1,16], index: 2, kind: input, shape index: {}]
  %s3 = inlined_call_operand.vmem [shape: f32[1,16], index: 3, kind: input, shape index: {}]
  %s4 = inlined_call_operand.vmem [shape: f32[1,16], index: 4, kind: input, shape index: {}]
  %s5 = inlined_call_operand.hbm [shape: f32[8,32], index: 5, kind: output, shape index: {}]
  %s6 = sld [smem:[#allocation0]]
  $region34: #{tpu_custom_call.1} parent=0
    _
  %s8 = ssub.s32 1, %s6
  %s9 = scalar_select 0, %s8, %s6
  %10 = sst [smem:[#allocation2]] %s0
  $region1: #{tpu_custom_call.1} parent=0
    #allocation3 [shape = 'u8[4096]{0}', space=vmem, size = 0x1000, scoped, tag = 'input window, operand 1, single buffered']
    #allocation4 [shape = 's32[1]{0}', space=sflag, size = 0x4, scoped, tag = 'scoped memory for tpu_custom_call.1']
    #allocation5 [shape = 's32[1]{0}', space=sflag, size = 0x4, scoped, tag = 'scoped memory for tpu_custom_call.1']
    #allocation6 [shape = 'u8[4096]{0}', space=vmem, size = 0x1000, scoped, tag = 'output window, operand 0, single buffered']
    %11 = vsyncpa [#allocation4], 0
    %12 = vsyncpa [#allocation5], 0
    // Predicated region
    $region2: #{tpu_custom_call.1} parent=1 // pred_check
      _
    $region3: #{tpu_custom_call.1} parent=1 // pred_check_branch
      %14 = sbr.rel (0) target = $region5
    $region4: #{tpu_custom_call.1} parent=1 // pred_region
      _
    $region5: #{tpu_custom_call.1} parent=1 // pred_fallthru
      _
    // Predicated region
    $region6: #{tpu_custom_call.1} parent=1 // pred_check
      _
    $region7: #{tpu_custom_call.1} parent=1 // pred_check_branch
      %16 = sbr.rel (0) target = $region9
    $region8: #{tpu_custom_call.1} parent=1 // pred_region
      %s18 = ssub.s32 128, 128
      %19 = vsyncadd [#allocation4], %s18
      %s21 = sshll.u32 [#allocation3], 4
      %s22 = int_to_ptr.vmem [resolvable:$true] %s21
      %24 = dma.hbm_to_vmem [thread:$0]  %s1, 128, %s22, [#allocation4]
    $region9: #{tpu_custom_call.1} parent=1 // pred_fallthru
      _
    // Predicated region
    $region10: #{tpu_custom_call.1} parent=1 // pred_check
      _
    $region11: #{tpu_custom_call.1} parent=1 // pred_check_branch
      %26 = sbr.rel (0) target = $region13
    $region12: #{tpu_custom_call.1} parent=1 // pred_region
      _
    $region13: #{tpu_custom_call.1} parent=1 // pred_fallthru
      _
    // Predicated region
    $region14: #{tpu_custom_call.1} parent=1 // pred_check
      _
    $region15: #{tpu_custom_call.1} parent=1 // pred_check_branch
      %28 = sbr.rel (0) target = $region17
    $region16: #{tpu_custom_call.1} parent=1 // pred_region
      _
    $region17: #{tpu_custom_call.1} parent=1 // pred_fallthru
      _
    // Predicated region
    $region18: #{tpu_custom_call.1} parent=1 // pred_check
      _
    $region19: #{tpu_custom_call.1} parent=1 // pred_check_branch
      %30 = sbr.rel (0) target = $region21
    $region20: #{tpu_custom_call.1} parent=1 // pred_region
      _
    $region21: #{tpu_custom_call.1} parent=1 // pred_fallthru
      _
    // Predicated region
    $region22: #{tpu_custom_call.1} parent=1 // pred_check
      _
    $region23: #{tpu_custom_call.1} parent=1 // pred_check_branch
      %32 = sbr.rel (0) target = $region25
    $region24: #{tpu_custom_call.1} parent=1 // pred_region
      %33 = dma.done [#allocation4], 128
    $region25: #{tpu_custom_call.1} parent=1 // pred_fallthru
      _
    %v34 = vld [vmem:[#allocation3] sm:$0xff]
    %v35 = vmul.f32 %v34, %v34
    %vm36 = vcmask 261120
    %v37 = vsel %vm36, %v35, 0.0
    %38 = vadd.xlane.f32.xlu0 %v37
    %v39 = vpop.xlane.xlu0 %38
    %v40 = vrsqrt.pop %v39
    %v41 = vmul.f32 %v39, %v40
    %vm42 = vcmp.eq.f32.partialorder %v39, inf
    %v43 = vsel %vm42, %v39, %v41
    %vm44 = vcmp.eq.f32.partialorder %v39, 0.0
    %v45 = vand.u32 %v39, 2147483648
    %v46 = vsel %vm44, %v45, %v43
    %v47 = vmax.f32 %v46, 1e-06
    %v48 = vld [vmem:[%s2] sm:$0x1]
    %v50 = vlaneseq
    %v51 = vshrl.u32 %v50, 7
    %v52 = vsub.s32 0, %v51
    %v53 = vrot.slane %v48, %v52
    %v55 = vmul.f32 %v47, %v53
    %s56 = sld [smem:[#allocation2]]
    %v57 = vand.u32 2147483647, %v55
    %vm58 = vcmp.le.f32.partialorder %v57, 0.7853982
    %vm59 = vcmp.lt.s32.totalorder %v55, 0
    %v60 = vand.u32 %v55, 2139095040
    %v61 = vshrl.u32 %v60, 23
    %v62 = vsub.s32 %v61, 127
    %v63 = vand.u32 2147483647, %v55
    %v64 = vand.u32 %v63, 8388607
    %v65 = vor.u32 %v64, 8388608
    %v66 = vsub.s32 0, %v65
    %v67 = vadd.s32 %v62, 1
    %vm68 = vcmp.gt.s32.totalorder %v67, 0
    %v69 = vsel %vm68, %v67, 0
    %v70 = vshrl.u32 %v69, 5
    %v71 = vand.u32 %v69, 31
    %v72 = vsub.s32 32, %v71
    %v73 = vshrl.u32 683565275, %v72
    %v74 = vshll.u32 683565275, %v71
    %v75 = vshrl.u32 2475754826, %v72
    %v76 = vor.u32 %v74, %v75
    %v77 = vshll.u32 2475754826, %v71
    %v78 = vshrl.u32 2131351028, %v72
    %v79 = vor.u32 %v77, %v78
    %v80 = vshll.u32 2131351028, %v71
    %v81 = vshrl.u32 2102212464, %v72
    %v82 = vor.u32 %v80, %v81
    %v83 = vshll.u32 2102212464, %v71
    %v84 = vshrl.u32 920167782, %v72
    %v85 = vor.u32 %v83, %v84
    %v86 = vshll.u32 920167782, %v71
    %v87 = vshrl.u32 1326507024, %v72
    %v88 = vor.u32 %v86, %v87
    %vm89 = vcmp.lt.s32.totalorder %v70, 1
    %vm90 = vcmp.lt.s32.totalorder %v70, 2
    %vm91 = vcmp.lt.s32.totalorder %v70, 3
    %vm92 = vcmp.lt.s32.totalorder %v70, 4
    %v93 = vsel %vm89, %v73, %v76
    %v94 = vsel %vm92, %v82, 2102212464
    %v95 = vsel %vm91, %v79, %v94
    %v96 = vsel %vm90, %v93, %v95
    %v97 = vsel %vm89, %v76, %v79
    %v98 = vsel %vm92, %v85, 920167782
    %v99 = vsel %vm91, %v82, %v98
    %v100 = vsel %vm90, %v97, %v99
    %v101 = vsel %vm89, %v79, %v82
    %v102 = vsel %vm92, %v88, 1326507024
    %v103 = vsel %vm91, %v85, %v102
    %v104 = vsel %vm90, %v101, %v103
    %v105 = vshll.u32 %v65, 8
    %v106 = vmul.u32.u64.compose %v105, %v104
    %v107 = vextract.low.u32 %v106
    %v108 = vextract.high.u32 %v106
    %v109 = vmul.u32.u64.compose %v105, %v100
    %v110 = vextract.low.u32 %v109
    %v111 = vextract.high.u32 %v109
    %v112 = vmul.u32 %v105, %v96
    %v113 = vadd.s32 %v108, %v110
    %vm114 = vc.u32 %v108, %v110
    %v115 = vadd.s32 %v111, 1
    %v116 = vsel %vm114, %v115, %v111
    %v117 = vadd.s32 %v112, %v116
    %v118 = vadd.s32 %v117, 536870912
    %v119 = vshrl.u32 %v118, 30
    %v120 = vshll.u32 %v119, 30
    %v121 = vsub.s32 %v117, %v120
    %vm122 = vcmp.lt.s32.totalorder %v121, 0
    %v123 = vsub.s32 0, %v121
    %v124 = vsel %vm122, %v123, %v121
    %v125 = vclz %v124
    %v126 = vsub.s32 %v125, 2
    %vm127 = vcmp.gt.s32.totalorder 0, %v126
    %v128 = vsel %vm127, 0, %v126
    %v129 = vsub.s32 32, %v128
    %v130 = vshll.u32 %v121, %v128
    %v131 = vshrl.u32 %v113, %v129
    %v132 = vor.u32 %v130, %v131
    %v133 = vsub.s32 4294967266, %v128
    %v134 = vadd.s32 %v133, 127
    %v135 = vshll.u32 %v134, 23
    %v136 = vor.u32 4788187, %v135
    %v137 = vand.u32 2147483647, %v136
    %v139 = vcvt.s32.f32 %v132
    %v140 = vmul.f32 %v139, %v137
    %v141 = vxor.u32 %v140, 2147483648
    %v142 = vsel %vm59, %v141, %v140
    %v143 = vsub.s32 4, %v119
    %v144 = vsel %vm59, %v143, %v119
    %v145 = vsel %vm58, %v55, %v142
    %v146 = vsel %vm58, 0, %v144
    %v147 = vcosq.f32.pop %v145
    %v148 = vsinq.f32.pop %v145
    %vm149 = vweird.f32 %v55
    %v150 = vand.u32 %v146, 3
    %vm151 = vcmp.lt.s32.totalorder %v150, 2
    %vm152 = vcmp.eq.s32.totalorder %v150, 0
    %v153 = vxor.u32 %v148, 2147483648
    %v154 = vsel %vm152, %v147, %v153
    %vm155 = vcmp.eq.s32.totalorder %v150, 2
    %v156 = vxor.u32 %v147, 2147483648
    %v157 = vsel %vm155, %v156, %v148
    %v158 = vsel %vm151, %v154, %v157
    %v159 = vsel %vm149, nan, %v158
    %v160 = vld [vmem:[%s3] sm:$0x1]
    %v162 = vlaneseq
    %v163 = vshrl.u32 %v162, 7
    %v164 = vsub.s32 0, %v163
    %v165 = vrot.slane %v160, %v164
    %v167 = vmul.f32 %v159, %v165
    %v168 = vand.u32 2147483647, %v55
    %vm169 = vcmp.le.f32.partialorder %v168, 0.7853982
    %vm170 = vcmp.lt.s32.totalorder %v55, 0
    %v171 = vand.u32 %v55, 2139095040
    %v172 = vshrl.u32 %v171, 23
    %v173 = vsub.s32 %v172, 127
    %v174 = vand.u32 2147483647, %v55
    %v175 = vand.u32 %v174, 8388607
    %v176 = vor.u32 %v175, 8388608
    %v177 = vsub.s32 0, %v176
    %v178 = vadd.s32 %v173, 1
    %vm179 = vcmp.gt.s32.totalorder %v178, 0
    %v180 = vsel %vm179, %v178, 0
    %v181 = vshrl.u32 %v180, 5
    %v182 = vand.u32 %v180, 31
    %v183 = vsub.s32 32, %v182
    %v184 = vshrl.u32 683565275, %v183
    %v185 = vshll.u32 683565275, %v182
    %v186 = vshrl.u32 2475754826, %v183
    %v187 = vor.u32 %v185, %v186
    %v188 = vshll.u32 2475754826, %v182
    %v189 = vshrl.u32 2131351028, %v183
    %v190 = vor.u32 %v188, %v189
    %v191 = vshll.u32 2131351028, %v182
    %v192 = vshrl.u32 2102212464, %v183
    %v193 = vor.u32 %v191, %v192
    %v194 = vshll.u32 2102212464, %v182
    %v195 = vshrl.u32 920167782, %v183
    %v196 = vor.u32 %v194, %v195
    %v197 = vshll.u32 920167782, %v182
    %v198 = vshrl.u32 1326507024, %v183
    %v199 = vor.u32 %v197, %v198
    %vm200 = vcmp.lt.s32.totalorder %v181, 1
    %vm201 = vcmp.lt.s32.totalorder %v181, 2
    %vm202 = vcmp.lt.s32.totalorder %v181, 3
    %vm203 = vcmp.lt.s32.totalorder %v181, 4
    %v204 = vsel %vm200, %v184, %v187
    %v205 = vsel %vm203, %v193, 2102212464
    %v206 = vsel %vm202, %v190, %v205
    %v207 = vsel %vm201, %v204, %v206
    %v208 = vsel %vm200, %v187, %v190
    %v209 = vsel %vm203, %v196, 920167782
    %v210 = vsel %vm202, %v193, %v209
    %v211 = vsel %vm201, %v208, %v210
    %v212 = vsel %vm200, %v190, %v193
    %v213 = vsel %vm203, %v199, 1326507024
    %v214 = vsel %vm202, %v196, %v213
    %v215 = vsel %vm201, %v212, %v214
    %v216 = vshll.u32 %v176, 8
    %v217 = vmul.u32.u64.compose %v216, %v215
    %v218 = vextract.low.u32 %v217
    %v219 = vextract.high.u32 %v217
    %v220 = vmul.u32.u64.compose %v216, %v211
    %v221 = vextract.low.u32 %v220
    %v222 = vextract.high.u32 %v220
    %v223 = vmul.u32 %v216, %v207
    %v224 = vadd.s32 %v219, %v221
    %vm225 = vc.u32 %v219, %v221
    %v226 = vadd.s32 %v222, 1
    %v227 = vsel %vm225, %v226, %v222
    %v228 = vadd.s32 %v223, %v227
    %v229 = vadd.s32 %v228, 536870912
    %v230 = vshrl.u32 %v229, 30
    %v231 = vshll.u32 %v230, 30
    %v232 = vsub.s32 %v228, %v231
    %vm233 = vcmp.lt.s32.totalorder %v232, 0
    %v234 = vsub.s32 0, %v232
    %v235 = vsel %vm233, %v234, %v232
    %v236 = vclz %v235
    %v237 = vsub.s32 %v236, 2
    %vm238 = vcmp.gt.s32.totalorder 0, %v237
    %v239 = vsel %vm238, 0, %v237
    %v240 = vsub.s32 32, %v239
    %v241 = vshll.u32 %v232, %v239
    %v242 = vshrl.u32 %v224, %v240
    %v243 = vor.u32 %v241, %v242
    %v244 = vsub.s32 4294967266, %v239
    %v245 = vadd.s32 %v244, 127
    %v246 = vshll.u32 %v245, 23
    %v247 = vor.u32 4788187, %v246
    %v248 = vand.u32 2147483647, %v247
    %v250 = vcvt.s32.f32 %v243
    %v251 = vmul.f32 %v250, %v248
    %v252 = vxor.u32 %v251, 2147483648
    %v253 = vsel %vm170, %v252, %v251
    %v254 = vsub.s32 4, %v230
    %v255 = vsel %vm170, %v254, %v230
    %v256 = vsel %vm169, %v55, %v253
    %v257 = vsel %vm169, 0, %v255
    %v258 = vcosq.f32.pop %v256
    %v259 = vsinq.f32.pop %v256
    %vm260 = vweird.f32 %v55
    %v261 = vadd.s32 %v257, 3
    %v262 = vand.u32 %v261, 3
    %vm263 = vcmp.lt.s32.totalorder %v262, 2
    %vm264 = vcmp.eq.s32.totalorder %v262, 0
    %v265 = vxor.u32 %v259, 2147483648
    %v266 = vsel %vm264, %v258, %v265
    %vm267 = vcmp.eq.s32.totalorder %v262, 2
    %v268 = vxor.u32 %v258, 2147483648
    %v269 = vsel %vm267, %v268, %v259
    %v270 = vsel %vm263, %v266, %v269
    %v271 = vsel %vm260, nan, %v270
    %v272 = vld [vmem:[%s4] sm:$0x1]
    %v274 = vlaneseq
    %v275 = vshrl.u32 %v274, 7
    %v276 = vsub.s32 0, %v275
    %v277 = vrot.slane %v272, %v276
    %v279 = vmul.f32 %v271, %v277
    %v280 = vadd.f32 %v167, %v279
    %vm281 = vcmask 130048
    %v282 = vsel %vm281, %v280, 0.0
    %283 = vadd.xlane.f32.xlu0 %v282
    %v284 = vpop.xlane.xlu0 %283
    %v285 = vstv %s56
    %v286 = vadd.f32 %v285, %v284
    %v287 = vmul.f32 %v286, %v34
    %288 = vst.msk [vmem:[#allocation6] sm:$0xff] %vm36, %v287
    // Predicated region
    $region26: #{tpu_custom_call.1} parent=1 // pred_check
      _
    $region27: #{tpu_custom_call.1} parent=1 // pred_check_branch
      %290 = sbr.rel (0) target = $region29
    $region28: #{tpu_custom_call.1} parent=1 // pred_region
      %s292 = ssub.s32 128, 128
      %293 = vsyncadd [#allocation5], %s292
      %s295 = sshll.u32 [#allocation6], 4
      %s296 = int_to_ptr.vmem [resolvable:$true] %s295
      %298 = dma.vmem_to_hbm [thread:$0]  %s296, 128, %s5, [#allocation5]
    $region29: #{tpu_custom_call.1} parent=1 // pred_fallthru
      _
    // Predicated region
    $region30: #{tpu_custom_call.1} parent=1 // pred_check
      _
    $region31: #{tpu_custom_call.1} parent=1 // pred_check_branch
      %300 = sbr.rel (0) target = $region33
    $region32: #{tpu_custom_call.1} parent=1 // pred_region
      %301 = dma.done [#allocation5], 128
    $region33: #{tpu_custom_call.1} parent=1 // pred_fallthru
      _
    %302 = vsyncpa [#allocation4], 1
    %303 = vsyncpa [#allocation5], 1

</llo_original>
